<compile_context>
chip_gen: v5e
topology: v5e:2x2
jax: 0.10.0
libtpu: 0.0.40
codegen_flags: <defaults>
</compile_context>

<pallas_src>
import jax
import jax.numpy as jnp
from jax import lax
from jax.experimental import pallas as pl
from jax.experimental.pallas import tpu as pltpu


def _round_up(x, m):
    return ((x + m - 1) // m) * m


def _prop_kernel(adj_ref, ego_ref, out_ref, acc_ref):
    """One (row-tile, K-tile) step of out = adj @ ego, f32 accumulation."""
    @pl.when(pl.program_id(1) == 0)
    def _():
        acc_ref[...] = jnp.zeros_like(acc_ref)

    acc_ref[...] += jnp.dot(adj_ref[...], ego_ref[...],
                            preferred_element_type=jnp.float32)

    @pl.when(pl.program_id(1) == pl.num_programs(1) - 1)
    def _():
        out_ref[...] = acc_ref[...]


def _propagate(adj_bf16, ego_bf16, *, tile):
    """One LightGCN propagation layer: f32[N_pad, D_pad] = adj @ ego (bf16 in)."""
    n_pad = adj_bf16.shape[0]
    d_pad = ego_bf16.shape[1]
    grid = (n_pad // tile, n_pad // tile)

    cost = pl.CostEstimate(
        flops=2 * n_pad * n_pad * d_pad,
        transcendentals=0,
        bytes_accessed=(n_pad * n_pad * 2                # bf16 adjacency, streamed once
                        + grid[0] * n_pad * d_pad * 2    # ego re-read per row tile
                        + n_pad * d_pad * 4))            # f32 output

    return pl.pallas_call(
        _prop_kernel,
        out_shape=jax.ShapeDtypeStruct((n_pad, d_pad), jnp.float32),
        grid_spec=pltpu.PrefetchScalarGridSpec(
            num_scalar_prefetch=0,
            grid=grid,
            in_specs=[pl.BlockSpec((tile, tile), lambda i, k: (i, k)),
                      pl.BlockSpec((tile, d_pad), lambda i, k: (k, 0))],
            out_specs=pl.BlockSpec((tile, d_pad), lambda i, k: (i, 0)),
            scratch_shapes=[pltpu.VMEM((tile, d_pad), jnp.float32)]),
        compiler_params=pltpu.CompilerParams(
            dimension_semantics=("parallel", "arbitrary"),
            vmem_limit_bytes=32 * 1024 * 1024),
        cost_estimate=cost,
    )(adj_bf16, ego_bf16)


def lgcn_encoder_forward(norm_adj, user_emb, item_emb, *, n_layers, scale):
    user_num, emb = user_emb.shape
    item_num = item_emb.shape[0]
    n = user_num + item_num
    assert norm_adj.shape == (n, n)

    # Tile size: 256 at realistic N; shrink to a multiple of 128 for tiny demos.
    tile = 256 if n > 256 else _round_up(max(n, 1), 128)
    n_pad = _round_up(n, tile)
    d_pad = _round_up(emb, 128)

    ego = jnp.concatenate([user_emb, item_emb], axis=0).astype(jnp.float32)

    # Zero-pad to tile/lane multiples (padded region contributes nothing).
    adj_p = jnp.zeros((n_pad, n_pad), jnp.bfloat16)
    adj_p = adj_p.at[:n, :n].set(norm_adj.astype(jnp.bfloat16))
    ego_p = jnp.zeros((n_pad, d_pad), jnp.float32).at[:n, :emb].set(ego)

    # Layer propagation in Pallas: ego^(k+1) = A_hat @ ego^(k); acc = sum_k ego^(k).
    acc = ego_p
    cur = ego_p
    for _ in range(n_layers):
        cur = _propagate(adj_p, cur.astype(jnp.bfloat16), tile=tile)
        acc = acc + cur

    mean = (acc * jnp.float32(1.0 / (n_layers + 1)))[:n, :emb]

    # Tail (O(N*D)) in XLA: user/item split + F.normalize(item, p=2, dim=-1)*scale.
    user_out = mean[:user_num]
    item = mean[user_num:]
    sumsq = jnp.sum(item * item, axis=-1, keepdims=True)
    # x / max(||x||_2, 1e-12)  ==  x * rsqrt(max(||x||^2, 1e-24))
    item_out = item * lax.rsqrt(jnp.maximum(sumsq, jnp.float32(1e-24)))
    item_out = item_out * jnp.float32(scale)
    return user_out, item_out


def _xavier_uniform(key, shape):
    fan_in, fan_out = shape[0], shape[1]
    bound = (6.0 / (fan_in + fan_out)) ** 0.5
    return jax.random.uniform(key, shape, jnp.float32, -bound, bound)


def _build_norm_adj(key, user_num, item_num):
    # deterministic random bipartite interaction matrix R, then
    # A = [[0, R], [R^T, 0]],  A_hat = D^-1/2 A D^-1/2   (LightGCN norm adj)
    r = (jax.random.uniform(key, (user_num, item_num)) < 0.3).astype(jnp.float32)
    n = user_num + item_num
    a = jnp.zeros((n, n), jnp.float32)
    a = a.at[:user_num, user_num:].set(r)
    a = a.at[user_num:, :user_num].set(r.T)
    deg = jnp.sum(a, axis=1)
    d_inv_sqrt = jnp.where(deg > 0, 1.0 / jnp.sqrt(deg), 0.0)
    return d_inv_sqrt[:, None] * a * d_inv_sqrt[None, :]


if __name__ == "__main__":
    user_num, item_num, emb_size = 24, 40, 32
    n_layers, scale = 2, 0.5

    key = jax.random.PRNGKey(0)
    k_adj, k_user, k_item, k_bias = jax.random.split(key, 4)

    norm_adj = _build_norm_adj(k_adj, user_num, item_num)
    user_emb = _xavier_uniform(k_user, (user_num, emb_size))
    item_emb = _xavier_uniform(k_item, (item_num, emb_size))
    item_bias = _xavier_uniform(k_bias, (item_num, 1))  # defined in __init__, unused in forward

    user_out, item_out = lgcn_encoder_forward(
        norm_adj, user_emb, item_emb, n_layers=n_layers, scale=scale)
    jax.block_until_ready((user_out, item_out))

    # plain-JAX f32 reference
    ego = jnp.concatenate([user_emb, item_emb], axis=0)
    outs = [ego]
    cur = ego
    for _ in range(n_layers):
        cur = norm_adj @ cur
        outs.append(cur)
    mean = jnp.mean(jnp.stack(outs, axis=1), axis=1)
    ref_user = mean[:user_num]
    ref_item_raw = mean[user_num:]
    ref_item = ref_item_raw / jnp.maximum(
        jnp.linalg.norm(ref_item_raw, axis=-1, keepdims=True), 1e-12) * scale

    assert user_out.shape == (user_num, emb_size)
    assert item_out.shape == (item_num, emb_size)
    # bf16 adjacency/activations in the kernel -> loosened tolerance vs f32 ref.
    assert jnp.allclose(user_out, ref_user, atol=1e-2, rtol=1e-2)
    assert jnp.allclose(item_out, ref_item, atol=1e-2, rtol=1e-2)

    print("KERNEL_OK")
</pallas_src>

<mosaic_0001>
module attributes {stable_mosaic.version = 11 : i64} {
  func.func @_prop_kernel(%arg0: i32, %arg1: i32, %arg2: memref<128x128xbf16, #tpu.memory_space<vmem>>, %arg3: memref<128x128xbf16, #tpu.memory_space<vmem>>, %arg4: memref<128x128xf32, #tpu.memory_space<vmem>>, %arg5: memref<128x128xf32, #tpu.memory_space<vmem>>) attributes {dimension_semantics = [#tpu.dimension_semantics<parallel>, #tpu.dimension_semantics<arbitrary>], iteration_bounds = array<i64: 1, 1>, scalar_prefetch = 0 : i64, scratch_operands = 1 : i64, tpu.core_type = #tpu.core_type<tc>, window_params = [{transform_indices = @transform_0, window_bounds = array<i64: 128, 128>}, {transform_indices = @transform_1, window_bounds = array<i64: 128, 128>}, {transform_indices = @transform_2, window_bounds = array<i64: 128, 128>}]} {
    %c0_i32 = arith.constant 0 : i32
    %0 = arith.cmpi eq, %arg1, %c0_i32 : i32
    %1 = arith.extui %0 : i1 to i32
    %c0_i32_0 = arith.constant 0 : i32
    %2 = arith.cmpi ne, %1, %c0_i32_0 : i32
    scf.if %2 {
      %cst_10 = arith.constant 0.000000e+00 : f32
      %12 = vector.broadcast %cst_10 : f32 to vector<128x128xf32>
      %c0_11 = arith.constant 0 : index
      %c0_12 = arith.constant 0 : index
      %13 = vector.load %arg5[%c0_11, %c0_12] : memref<128x128xf32, #tpu.memory_space<vmem>>, vector<128x128xf32>
      tpu.vector_store %arg5[%c0_11, %c0_12], %12 {strides = array<i32>} : memref<128x128xf32, #tpu.memory_space<vmem>>, vector<128x128xf32>,
    } else {
    }
    %c0 = arith.constant 0 : index
    %c0_1 = arith.constant 0 : index
    %3 = vector.load %arg5[%c0, %c0_1] : memref<128x128xf32, #tpu.memory_space<vmem>>, vector<128x128xf32>
    %c0_2 = arith.constant 0 : index
    %c0_3 = arith.constant 0 : index
    %4 = vector.load %arg2[%c0_2, %c0_3] : memref<128x128xbf16, #tpu.memory_space<vmem>>, vector<128x128xbf16>
    %c0_4 = arith.constant 0 : index
    %c0_5 = arith.constant 0 : index
    %5 = vector.load %arg3[%c0_4, %c0_5] : memref<128x128xbf16, #tpu.memory_space<vmem>>, vector<128x128xbf16>
    %cst = arith.constant dense<0.000000e+00> : vector<128x128xf32>
    %6 = tpu.matmul %4, %5, %cst {dimension_numbers = #tpu.dot_dimension_numbers<[1], [0], [0], [1], [0, 0, 1, 1], [], []>} : vector<128x128xbf16>, vector<128x128xbf16>, vector<128x128xf32> -> vector<128x128xf32>
    %7 = arith.addf %3, %6 : vector<128x128xf32>
    %c0_6 = arith.constant 0 : index
    %c0_7 = arith.constant 0 : index
    %8 = vector.load %arg5[%c0_6, %c0_7] : memref<128x128xf32, #tpu.memory_space<vmem>>, vector<128x128xf32>
    tpu.vector_store %arg5[%c0_6, %c0_7], %7 {strides = array<i32>} : memref<128x128xf32, #tpu.memory_space<vmem>>, vector<128x128xf32>,
    %c0_i32_8 = arith.constant 0 : i32
    %9 = arith.cmpi eq, %arg1, %c0_i32_8 : i32
    %10 = arith.extui %9 : i1 to i32
    %c0_i32_9 = arith.constant 0 : i32
    %11 = arith.cmpi ne, %10, %c0_i32_9 : i32
    scf.if %11 {
      %c0_10 = arith.constant 0 : index
      %c0_11 = arith.constant 0 : index
      %12 = vector.load %arg5[%c0_10, %c0_11] : memref<128x128xf32, #tpu.memory_space<vmem>>, vector<128x128xf32>
      %c0_12 = arith.constant 0 : index
      %c0_13 = arith.constant 0 : index
      %13 = vector.load %arg4[%c0_12, %c0_13] : memref<128x128xf32, #tpu.memory_space<vmem>>, vector<128x128xf32>
      tpu.vector_store %arg4[%c0_12, %c0_13], %12 {strides = array<i32>} : memref<128x128xf32, #tpu.memory_space<vmem>>, vector<128x128xf32>,
    } else {
    }
    return
  }
  func.func @transform_0(%arg0: i32, %arg1: i32) -> (i32, i32) {
    %c0_i32 = arith.constant 0 : i32
    return %arg0, %arg1 : i32, i32
  }
  func.func @transform_1(%arg0: i32, %arg1: i32) -> (i32, i32) {
    %c0_i32 = arith.constant 0 : i32
    %c0_i32_0 = arith.constant 0 : i32
    return %arg1, %c0_i32 : i32, i32
  }
  func.func @transform_2(%arg0: i32, %arg1: i32) -> (i32, i32) {
    %c0_i32 = arith.constant 0 : i32
    %c0_i32_0 = arith.constant 0 : i32
    return %arg0, %c0_i32 : i32, i32
  }
}

</mosaic_0001>

<llo_original>
// kernel: tpu_custom_call.1
$region0: #{tpu_custom_call.1}
  #allocation0 [shape = 'u32[]', space=smem, size = 0x4, offset = 0x4, fixed_abs, tag = 'smem constant byte address 0x4 - core index']
  #allocation1 [shape = 'u32[72,128]{1,0:T(1,128)}', space=vmem, size = 0x9000, scoped, tag = 'internal scratch']
  #allocation2 [shape = 'f32[128,128]{1,0:T(8,128)}', space=vmem, size = 0x10000, scoped, tag = 'scratch operand']
  %s0 = inlined_call_operand.hbm [shape: bf16[128,128], index: 0, kind: input, shape index: {}]
  %s1 = inlined_call_operand.hbm [shape: bf16[128,128], index: 1, kind: input, shape index: {}]
  %s2 = inlined_call_operand.hbm [shape: f32[128,128], index: 2, kind: output, shape index: {}]
  %s3 = sld [smem:[#allocation0]]
  $region34: #{tpu_custom_call.1} parent=0
    _
  %s5 = ssub.s32 1, %s3
  %s6 = scalar_select 0, %s5, %s3
  $region1: #{tpu_custom_call.1} parent=0
    #allocation3 [shape = 'u8[32768]{0}', space=vmem, size = 0x8000, scoped, tag = 'input window, operand 0, single buffered']
    #allocation4 [shape = 's32[1]{0}', space=sflag, size = 0x4, scoped, tag = 'scoped memory for tpu_custom_call.1']
    #allocation5 [shape = 's32[1]{0}', space=sflag, size = 0x4, scoped, tag = 'scoped memory for tpu_custom_call.1']
    #allocation6 [shape = 'u8[32768]{0}', space=vmem, size = 0x8000, scoped, tag = 'input window, operand 1, single buffered']
    #allocation7 [shape = 's32[1]{0}', space=sflag, size = 0x4, scoped, tag = 'scoped memory for tpu_custom_call.1']
    #allocation8 [shape = 'u8[65536]{0}', space=vmem, size = 0x10000, scoped, tag = 'output window, operand 0, single buffered']
    %7 = vsyncpa [#allocation4], 0
    %8 = vsyncpa [#allocation7], 0
    %9 = vsyncpa [#allocation5], 0
    // Predicated region
    $region2: #{tpu_custom_call.1} parent=1 // pred_check
      _
    $region3: #{tpu_custom_call.1} parent=1 // pred_check_branch
      %11 = sbr.rel (0) target = $region5
    $region4: #{tpu_custom_call.1} parent=1 // pred_region
      %13 = vsyncadd [#allocation4], 0
      %s14 = sshll.u32 %s0, 4
      %s15 = int_to_ptr.hbm [resolvable:$true] %s14
      %s16 = sshll.u32 [#allocation3], 4
      %s17 = int_to_ptr.vmem [resolvable:$true] %s16
      %22 = dma.hbm_to_vmem [thread:$0]  %s15, 1024, %s17, [#allocation4], 64, 64, 4
    $region5: #{tpu_custom_call.1} parent=1 // pred_fallthru
      _
    // Predicated region
    $region6: #{tpu_custom_call.1} parent=1 // pred_check
      _
    $region7: #{tpu_custom_call.1} parent=1 // pred_check_branch
      %24 = sbr.rel (0) target = $region9
    $region8: #{tpu_custom_call.1} parent=1 // pred_region
      %26 = vsyncadd [#allocation7], 0
      %s27 = sshll.u32 %s1, 4
      %s28 = int_to_ptr.hbm [resolvable:$true] %s27
      %s29 = sshll.u32 [#allocation6], 4
      %s30 = int_to_ptr.vmem [resolvable:$true] %s29
      %35 = dma.hbm_to_vmem [thread:$0]  %s28, 1024, %s30, [#allocation7], 64, 64, 4
    $region9: #{tpu_custom_call.1} parent=1 // pred_fallthru
      _
    // Predicated region
    $region10: #{tpu_custom_call.1} parent=1 // pred_check
      _
    $region11: #{tpu_custom_call.1} parent=1 // pred_check_branch
      %37 = sbr.rel (0) target = $region13
    $region12: #{tpu_custom_call.1} parent=1 // pred_region
      %39 = dma.done [#allocation4], 1024
    $region13: #{tpu_custom_call.1} parent=1 // pred_fallthru
      _
    // Predicated region
    $region14: #{tpu_custom_call.1} parent=1 // pred_check
      _
    $region15: #{tpu_custom_call.1} parent=1 // pred_check_branch
      %41 = sbr.rel (0) target = $region17
    $region16: #{tpu_custom_call.1} parent=1 // pred_region
      %43 = dma.done [#allocation7], 1024
    $region17: #{tpu_custom_call.1} parent=1 // pred_fallthru
      _
    %p44 = scmp.eq.s32.totalorder 0, 0
    // Predicated region
    $region18: #{tpu_custom_call.1} parent=1 // pred_check
      %p45 = pneg %p44
    $region19: #{tpu_custom_call.1} parent=1 // pred_check_branch
      %47 = sbr.rel (%p45) target = $region21
    $region20: #{tpu_custom_call.1} parent=1 // pred_region
      %48 = vst [vmem:[#allocation2] sm:$0xff] 0.0
      %49 = vst [vmem:[#allocation2 + $0x8] sm:$0xff] 0.0
      %50 = vst [vmem:[#allocation2 + $0x10] sm:$0xff] 0.0
      %51 = vst [vmem:[#allocation2 + $0x18] sm:$0xff] 0.0
      %52 = vst [vmem:[#allocation2 + $0x20] sm:$0xff] 0.0
      %53 = vst [vmem:[#allocation2 + $0x28] sm:$0xff] 0.0
      %54 = vst [vmem:[#allocation2 + $0x30] sm:$0xff] 0.0
      %55 = vst [vmem:[#allocation2 + $0x38] sm:$0xff] 0.0
      %56 = vst [vmem:[#allocation2 + $0x40] sm:$0xff] 0.0
      %57 = vst [vmem:[#allocation2 + $0x48] sm:$0xff] 0.0
      %58 = vst [vmem:[#allocation2 + $0x50] sm:$0xff] 0.0
      %59 = vst [vmem:[#allocation2 + $0x58] sm:$0xff] 0.0
      %60 = vst [vmem:[#allocation2 + $0x60] sm:$0xff] 0.0
      %61 = vst [vmem:[#allocation2 + $0x68] sm:$0xff] 0.0
      %62 = vst [vmem:[#allocation2 + $0x70] sm:$0xff] 0.0
      %63 = vst [vmem:[#allocation2 + $0x78] sm:$0xff] 0.0
    $region21: #{tpu_custom_call.1} parent=1 // pred_fallthru
      _
    %v64 = vld [vmem:[#allocation2] sm:$0xff]
    %v65 = vld [vmem:[#allocation2 + $0x8] sm:$0xff]
    %v66 = vld [vmem:[#allocation2 + $0x10] sm:$0xff]
    %v67 = vld [vmem:[#allocation2 + $0x18] sm:$0xff]
    %v68 = vld [vmem:[#allocation2 + $0x20] sm:$0xff]
    %v69 = vld [vmem:[#allocation2 + $0x28] sm:$0xff]
    %v70 = vld [vmem:[#allocation2 + $0x30] sm:$0xff]
    %v71 = vld [vmem:[#allocation2 + $0x38] sm:$0xff]
    %v72 = vld [vmem:[#allocation2 + $0x40] sm:$0xff]
    %v73 = vld [vmem:[#allocation2 + $0x48] sm:$0xff]
    %v74 = vld [vmem:[#allocation2 + $0x50] sm:$0xff]
    %v75 = vld [vmem:[#allocation2 + $0x58] sm:$0xff]
    %v76 = vld [vmem:[#allocation2 + $0x60] sm:$0xff]
    %v77 = vld [vmem:[#allocation2 + $0x68] sm:$0xff]
    %v78 = vld [vmem:[#allocation2 + $0x70] sm:$0xff]
    %v79 = vld [vmem:[#allocation2 + $0x78] sm:$0xff]
    %v80 = vld [vmem:[#allocation3] sm:$0xf]
    %v81 = vld [vmem:[#allocation3 + $0x4] sm:$0xf]
    %v82 = vld [vmem:[#allocation3 + $0x8] sm:$0xf]
    %v83 = vld [vmem:[#allocation3 + $0xc] sm:$0xf]
    %v84 = vld [vmem:[#allocation3 + $0x10] sm:$0xf]
    %v85 = vld [vmem:[#allocation3 + $0x14] sm:$0xf]
    %v86 = vld [vmem:[#allocation3 + $0x18] sm:$0xf]
    %v87 = vld [vmem:[#allocation3 + $0x1c] sm:$0xf]
    %v88 = vld [vmem:[#allocation3 + $0x20] sm:$0xf]
    %v89 = vld [vmem:[#allocation3 + $0x24] sm:$0xf]
    %v90 = vld [vmem:[#allocation3 + $0x28] sm:$0xf]
    %v91 = vld [vmem:[#allocation3 + $0x2c] sm:$0xf]
    %v92 = vld [vmem:[#allocation3 + $0x30] sm:$0xf]
    %v93 = vld [vmem:[#allocation3 + $0x34] sm:$0xf]
    %v94 = vld [vmem:[#allocation3 + $0x38] sm:$0xf]
    %v95 = vld [vmem:[#allocation3 + $0x3c] sm:$0xf]
    %v96 = vld [vmem:[#allocation6] sm:$0xf]
    %v97 = vld [vmem:[#allocation6 + $0x4] sm:$0xf]
    %v98 = vld [vmem:[#allocation6 + $0x8] sm:$0xf]
    %v99 = vld [vmem:[#allocation6 + $0xc] sm:$0xf]
    %v100 = vld [vmem:[#allocation6 + $0x10] sm:$0xf]
    %v101 = vld [vmem:[#allocation6 + $0x14] sm:$0xf]
    %v102 = vld [vmem:[#allocation6 + $0x18] sm:$0xf]
    %v103 = vld [vmem:[#allocation6 + $0x1c] sm:$0xf]
    %v104 = vld [vmem:[#allocation6 + $0x20] sm:$0xf]
    %v105 = vld [vmem:[#allocation6 + $0x24] sm:$0xf]
    %v106 = vld [vmem:[#allocation6 + $0x28] sm:$0xf]
    %v107 = vld [vmem:[#allocation6 + $0x2c] sm:$0xf]
    %v108 = vld [vmem:[#allocation6 + $0x30] sm:$0xf]
    %v109 = vld [vmem:[#allocation6 + $0x34] sm:$0xf]
    %v110 = vld [vmem:[#allocation6 + $0x38] sm:$0xf]
    %v111 = vld [vmem:[#allocation6 + $0x3c] sm:$0xf]
    %v128 = vunpack.c.l.b16 %v80
    %v129 = vunpack.c.l.b16 %v81
    %v130 = vunpack.c.l.b16 %v82
    %v131 = vunpack.c.l.b16 %v83
    %v132 = vunpack.c.l.b16 %v84
    %v133 = vunpack.c.l.b16 %v85
    %v134 = vunpack.c.l.b16 %v86
    %v135 = vunpack.c.l.b16 %v87
    %v136 = vunpack.c.l.b16 %v88
    %v137 = vunpack.c.l.b16 %v89
    %v138 = vunpack.c.l.b16 %v90
    %v139 = vunpack.c.l.b16 %v91
    %v140 = vunpack.c.l.b16 %v92
    %v141 = vunpack.c.l.b16 %v93
    %v142 = vunpack.c.l.b16 %v94
    %v143 = vunpack.c.l.b16 %v95
    %v144 = vpack.c.b16 %v129, %v128
    %v145 = vpack.c.b16 %v131, %v130
    %v146 = vpack.c.b16 %v133, %v132
    %v147 = vpack.c.b16 %v135, %v134
    %v148 = vpack.c.b16 %v137, %v136
    %v149 = vpack.c.b16 %v139, %v138
    %v150 = vpack.c.b16 %v141, %v140
    %v151 = vpack.c.b16 %v143, %v142
    %v176 = vunpack.c.l.b16 %v96
    %v177 = vunpack.c.l.b16 %v97
    %v178 = vunpack.c.l.b16 %v98
    %v179 = vunpack.c.l.b16 %v99
    %v180 = vunpack.c.l.b16 %v100
    %v181 = vunpack.c.l.b16 %v101
    %v182 = vunpack.c.l.b16 %v102
    %v183 = vunpack.c.l.b16 %v103
    %v184 = vunpack.c.l.b16 %v104
    %v185 = vunpack.c.l.b16 %v105
    %v186 = vunpack.c.l.b16 %v106
    %v187 = vunpack.c.l.b16 %v107
    %v188 = vunpack.c.l.b16 %v108
    %v189 = vunpack.c.l.b16 %v109
    %v190 = vunpack.c.l.b16 %v110
    %v191 = vunpack.c.l.b16 %v111
    %v192 = vpack.c.b16 %v177, %v176
    %v193 = vpack.c.b16 %v179, %v178
    %v194 = vpack.c.b16 %v181, %v180
    %v195 = vpack.c.b16 %v183, %v182
    %v196 = vpack.c.b16 %v185, %v184
    %v197 = vpack.c.b16 %v187, %v186
    %v198 = vpack.c.b16 %v189, %v188
    %v199 = vpack.c.b16 %v191, %v190
    %208 = vmatpush.bf16.msra.mxu0 %v199
    %209 = vmatpush.bf16.msra.mxu0 %v198
    %210 = vmatpush.bf16.msra.mxu0 %v197
    %211 = vmatpush.bf16.msra.mxu0 %v196
    %212 = vmatpush.bf16.msra.mxu0 %v195
    %213 = vmatpush.bf16.msra.mxu0 %v194
    %214 = vmatpush.bf16.msra.mxu0 %v193
    %215 = vmatpush.bf16.msra.mxu0 %v192
    %216 = vmatmul.bf16.gmra.mxu0 %v144
    %v217 = vpop.f32.mrf.mxu0
    %v218 = vadd.f32 0.0, %v217
    %v219 = vpop.f32.mrf.mxu0
    %v220 = vadd.f32 0.0, %v219
    %221 = vmatmul.bf16.gmra.mxu0 %v145
    %v222 = vpop.f32.mrf.mxu0
    %v223 = vadd.f32 0.0, %v222
    %v224 = vpop.f32.mrf.mxu0
    %v225 = vadd.f32 0.0, %v224
    %226 = vmatmul.bf16.gmra.mxu0 %v146
    %v227 = vpop.f32.mrf.mxu0
    %v228 = vadd.f32 0.0, %v227
    %v229 = vpop.f32.mrf.mxu0
    %v230 = vadd.f32 0.0, %v229
    %231 = vmatmul.bf16.gmra.mxu0 %v147
    %v232 = vpop.f32.mrf.mxu0
    %v233 = vadd.f32 0.0, %v232
    %v234 = vpop.f32.mrf.mxu0
    %v235 = vadd.f32 0.0, %v234
    %236 = vmatmul.bf16.gmra.mxu0 %v148
    %v237 = vpop.f32.mrf.mxu0
    %v238 = vadd.f32 0.0, %v237
    %v239 = vpop.f32.mrf.mxu0
    %v240 = vadd.f32 0.0, %v239
    %241 = vmatmul.bf16.gmra.mxu0 %v149
    %v242 = vpop.f32.mrf.mxu0
    %v243 = vadd.f32 0.0, %v242
    %v244 = vpop.f32.mrf.mxu0
    %v245 = vadd.f32 0.0, %v244
    %246 = vmatmul.bf16.gmra.mxu0 %v150
    %v247 = vpop.f32.mrf.mxu0
    %v248 = vadd.f32 0.0, %v247
    %v249 = vpop.f32.mrf.mxu0
    %v250 = vadd.f32 0.0, %v249
    %251 = vmatmul.bf16.gmra.mxu0 %v151
    %v252 = vpop.f32.mrf.mxu0
    %v253 = vadd.f32 0.0, %v252
    %v254 = vpop.f32.mrf.mxu0
    %v255 = vadd.f32 0.0, %v254
    %256 = vdwg.mxu0
    %v257 = vadd.f32 %v64, %v218
    %v258 = vadd.f32 %v65, %v220
    %v259 = vadd.f32 %v66, %v223
    %v260 = vadd.f32 %v67, %v225
    %v261 = vadd.f32 %v68, %v228
    %v262 = vadd.f32 %v69, %v230
    %v263 = vadd.f32 %v70, %v233
    %v264 = vadd.f32 %v71, %v235
    %v265 = vadd.f32 %v72, %v238
    %v266 = vadd.f32 %v73, %v240
    %v267 = vadd.f32 %v74, %v243
    %v268 = vadd.f32 %v75, %v245
    %v269 = vadd.f32 %v76, %v248
    %v270 = vadd.f32 %v77, %v250
    %v271 = vadd.f32 %v78, %v253
    %v272 = vadd.f32 %v79, %v255
    %273 = vst [vmem:[#allocation2] sm:$0xff] %v257
    %274 = vst [vmem:[#allocation2 + $0x8] sm:$0xff] %v258
    %275 = vst [vmem:[#allocation2 + $0x10] sm:$0xff] %v259
    %276 = vst [vmem:[#allocation2 + $0x18] sm:$0xff] %v260
    %277 = vst [vmem:[#allocation2 + $0x20] sm:$0xff] %v261
    %278 = vst [vmem:[#allocation2 + $0x28] sm:$0xff] %v262
    %279 = vst [vmem:[#allocation2 + $0x30] sm:$0xff] %v263
    %280 = vst [vmem:[#allocation2 + $0x38] sm:$0xff] %v264
    %281 = vst [vmem:[#allocation2 + $0x40] sm:$0xff] %v265
    %282 = vst [vmem:[#allocation2 + $0x48] sm:$0xff] %v266
    %283 = vst [vmem:[#allocation2 + $0x50] sm:$0xff] %v267
    %284 = vst [vmem:[#allocation2 + $0x58] sm:$0xff] %v268
    %285 = vst [vmem:[#allocation2 + $0x60] sm:$0xff] %v269
    %286 = vst [vmem:[#allocation2 + $0x68] sm:$0xff] %v270
    %287 = vst [vmem:[#allocation2 + $0x70] sm:$0xff] %v271
    %288 = vst [vmem:[#allocation2 + $0x78] sm:$0xff] %v272
    // Predicated region
    $region22: #{tpu_custom_call.1} parent=1 // pred_check
      %p289 = pneg %p44
    $region23: #{tpu_custom_call.1} parent=1 // pred_check_branch
      %291 = sbr.rel (%p289) target = $region25
    $region24: #{tpu_custom_call.1} parent=1 // pred_region
      %v292 = vld [vmem:[#allocation2] sm:$0xff]
      %v293 = vld [vmem:[#allocation2 + $0x8] sm:$0xff]
      %v294 = vld [vmem:[#allocation2 + $0x10] sm:$0xff]
      %v295 = vld [vmem:[#allocation2 + $0x18] sm:$0xff]
      %v296 = vld [vmem:[#allocation2 + $0x20] sm:$0xff]
      %v297 = vld [vmem:[#allocation2 + $0x28] sm:$0xff]
      %v298 = vld [vmem:[#allocation2 + $0x30] sm:$0xff]
      %v299 = vld [vmem:[#allocation2 + $0x38] sm:$0xff]
      %v300 = vld [vmem:[#allocation2 + $0x40] sm:$0xff]
      %v301 = vld [vmem:[#allocation2 + $0x48] sm:$0xff]
      %v302 = vld [vmem:[#allocation2 + $0x50] sm:$0xff]
      %v303 = vld [vmem:[#allocation2 + $0x58] sm:$0xff]
      %v304 = vld [vmem:[#allocation2 + $0x60] sm:$0xff]
      %v305 = vld [vmem:[#allocation2 + $0x68] sm:$0xff]
      %v306 = vld [vmem:[#allocation2 + $0x70] sm:$0xff]
      %v307 = vld [vmem:[#allocation2 + $0x78] sm:$0xff]
      %308 = vst [vmem:[#allocation8] sm:$0xff] %v292
      %309 = vst [vmem:[#allocation8 + $0x8] sm:$0xff] %v293
      %310 = vst [vmem:[#allocation8 + $0x10] sm:$0xff] %v294
      %311 = vst [vmem:[#allocation8 + $0x18] sm:$0xff] %v295
      %312 = vst [vmem:[#allocation8 + $0x20] sm:$0xff] %v296
      %313 = vst [vmem:[#allocation8 + $0x28] sm:$0xff] %v297
      %314 = vst [vmem:[#allocation8 + $0x30] sm:$0xff] %v298
      %315 = vst [vmem:[#allocation8 + $0x38] sm:$0xff] %v299
      %316 = vst [vmem:[#allocation8 + $0x40] sm:$0xff] %v300
      %317 = vst [vmem:[#allocation8 + $0x48] sm:$0xff] %v301
      %318 = vst [vmem:[#allocation8 + $0x50] sm:$0xff] %v302
      %319 = vst [vmem:[#allocation8 + $0x58] sm:$0xff] %v303
      %320 = vst [vmem:[#allocation8 + $0x60] sm:$0xff] %v304
      %321 = vst [vmem:[#allocation8 + $0x68] sm:$0xff] %v305
      %322 = vst [vmem:[#allocation8 + $0x70] sm:$0xff] %v306
      %323 = vst [vmem:[#allocation8 + $0x78] sm:$0xff] %v307
    $region25: #{tpu_custom_call.1} parent=1 // pred_fallthru
      _
    // Predicated region
    $region26: #{tpu_custom_call.1} parent=1 // pred_check
      _
    $region27: #{tpu_custom_call.1} parent=1 // pred_check_branch
      %325 = sbr.rel (0) target = $region29
    $region28: #{tpu_custom_call.1} parent=1 // pred_region
      %327 = vsyncadd [#allocation5], 0
      %s328 = sshll.u32 [#allocation8], 4
      %s329 = int_to_ptr.vmem [resolvable:$true] %s328
      %s330 = sshll.u32 %s2, 4
      %s331 = int_to_ptr.hbm [resolvable:$true] %s330
      %336 = dma.vmem_to_hbm [thread:$0]  %s329, 2048, %s331, [#allocation5], 128, 128, 8
    $region29: #{tpu_custom_call.1} parent=1 // pred_fallthru
      _
    // Predicated region
    $region30: #{tpu_custom_call.1} parent=1 // pred_check
      _
    $region31: #{tpu_custom_call.1} parent=1 // pred_check_branch
      %338 = sbr.rel (0) target = $region33
    $region32: #{tpu_custom_call.1} parent=1 // pred_region
      %340 = dma.done [#allocation5], 2048
    $region33: #{tpu_custom_call.1} parent=1 // pred_fallthru
      _
    %341 = vsyncpa [#allocation4], 1
    %342 = vsyncpa [#allocation7], 1
    %343 = vsyncpa [#allocation5], 1

</llo_original>
